<compile_context>
chip_gen: v5e
topology: v5e:2x2
jax: 0.10.0
libtpu: 0.0.40
codegen_flags: <defaults>
</compile_context>

<pallas_src>
import jax
import jax.numpy as jnp
from jax import lax
from jax.experimental import pallas as pl
from jax.experimental.pallas import tpu as pltpu

CONTEXT_SIZE = 2
N_DIM = 100
HIDDEN = 128
TILE_M = 128   # batch tile (128-aligned: fine on v5e, v6e, v7x)
LANE = 128

test_sentence = (
    "When forty winters shall besiege thy brow,\nAnd dig deep trenches in thy "
    "beauty's field,\nThy youth's proud livery so gazed on now,\nWill be a "
    "totter'd weed of small worth held:\nThen being asked, where all thy beauty "
    "lies,\nWhere all the treasure of thy lusty days;\nTo say, within thine own "
    "deep sunken eyes,\nWere an all-eating shame, and thriftless praise.\nHow "
    "much more praise deserv'd thy beauty's use,\nIf thou couldst answer 'This "
    "fair child of mine\nShall sum my count, and make my old excuse,'\nProving "
    "his beauty by succession thine!\nThis were to be new made when thou art "
    "old,\nAnd see thy blood warm when thou feel'st it cold."
).split()


def _round_up(x, m):
    return (x + m - 1) // m * m


def ngram_kernel(idx_ref, ew1_ref, b1_ref, w2_ref, b2_ref, out_ref):
    # idx_ref : (TILE_M, C)            int32  word indices per context row
    # ew1_ref : (C*V_PAD, HIDDEN)      f32    embedding-table @ linear1 fused weight (resident)
    # b1_ref  : (1, HIDDEN)            f32
    # w2_ref  : (HIDDEN, V_PAD)        f32    linear2 weight zero-padded in V (resident)
    # b2_ref  : (1, V_PAD)             f32    padded vocab lanes hold -1e30 (masks them from softmax)
    # out_ref : (TILE_M, V_PAD)        f32    log-probs (lane-dense store)
    tile_m, c_size = idx_ref.shape
    k = ew1_ref.shape[0]
    v_pad = k // c_size

    idx = idx_ref[...]
    iota = lax.broadcasted_iota(jnp.int32, (tile_m, k), 1)

    # Combined one-hot over all context slots: slot c's word selects row c*V_PAD + idx[:, c].
    sel = iota == idx[:, 0:1]
    for c in range(1, c_size):  # static, tiny (CONTEXT_SIZE = 2)
        sel = jnp.logical_or(sel, iota == (idx[:, c:c + 1] + c * v_pad))
    onehot = sel.astype(jnp.float32)

    # Embedding gather + linear1 as a single MXU matmul, then ReLU.
    h = jnp.dot(onehot, ew1_ref[...], preferred_element_type=jnp.float32) + b1_ref[...]
    h = jnp.maximum(h, 0.0)

    logits = jnp.dot(h, w2_ref[...], preferred_element_type=jnp.float32) + b2_ref[...]
    # Padded vocab lanes carry a -1e30 bias, so they vanish from the max / exp-sum.
    m = jnp.max(logits, axis=-1, keepdims=True)
    shifted = logits - m
    lse = jnp.log(jnp.sum(jnp.exp(shifted), axis=-1, keepdims=True))
    out_ref[...] = shifted - lse


@jax.jit
def ngram_forward_batched(x_idx, emb_table, w1_t, b1, w2_t, b2):
    """x_idx: (B, CONTEXT_SIZE) int32. Returns (B, vocab) log-probs; each row equals the
    PyTorch NgramModel forward for that context."""
    b_size, c_size = x_idx.shape
    vocab, n_dim = emb_table.shape
    hidden = w1_t.shape[1]

    v_pad = _round_up(vocab, LANE)
    b_pad = _round_up(max(b_size, TILE_M), TILE_M)

    # Fold embedding into linear1: ew1[c] = emb_table @ W1_slot[c]  (one-time, tiny).
    w1_slots = w1_t.reshape(c_size, n_dim, hidden)
    ew1 = jnp.einsum("vd,cdh->cvh", emb_table, w1_slots,
                     precision=lax.Precision.HIGHEST,
                     preferred_element_type=jnp.float32)          # (C, vocab, HIDDEN)
    ew1_p = jnp.zeros((c_size, v_pad, hidden), jnp.float32).at[:, :vocab, :].set(ew1)
    ew1_p = ew1_p.reshape(c_size * v_pad, hidden)                  # slot c lives at rows [c*V_PAD, ...)

    b1_p = b1.reshape(1, hidden).astype(jnp.float32)
    w2_p = jnp.zeros((hidden, v_pad), jnp.float32).at[:, :vocab].set(w2_t)
    b2_p = jnp.full((1, v_pad), -1e30, jnp.float32).at[0, :vocab].set(b2)
    idx_p = jnp.zeros((b_pad, c_size), jnp.int32).at[:b_size].set(x_idx.astype(jnp.int32))

    resident = lambda i: (0, 0)
    out = pl.pallas_call(
        ngram_kernel,
        out_shape=jax.ShapeDtypeStruct((b_pad, v_pad), jnp.float32),
        grid=(b_pad // TILE_M,),
        in_specs=[
            pl.BlockSpec((TILE_M, c_size), lambda i: (i, 0)),       # indices: tiled over batch
            pl.BlockSpec((c_size * v_pad, hidden), resident),        # fused emb@w1: resident
            pl.BlockSpec((1, hidden), resident),                     # b1: resident
            pl.BlockSpec((hidden, v_pad), resident),                 # w2: resident
            pl.BlockSpec((1, v_pad), resident),                      # b2 (with -1e30 mask): resident
        ],
        out_specs=pl.BlockSpec((TILE_M, v_pad), lambda i: (i, 0)),
        compiler_params=pltpu.CompilerParams(
            dimension_semantics=("parallel",)),  # batch axis shards across TCs on v7x
    )(idx_p, ew1_p, b1_p, w2_p, b2_p)
    return out[:b_size, :vocab]


def ngram_forward(x_idx, emb_table, w1_t, b1, w2_t, b2):
    """Single-context forward matching the PyTorch module: x_idx (CONTEXT_SIZE,) -> (1, vocab)."""
    return ngram_forward_batched(x_idx.reshape(1, -1), emb_table, w1_t, b1, w2_t, b2)


def make_params(vocab_size, context_size, n_dim, hidden, key):
    k_emb, k_w1, k_b1, k_w2, k_b2 = jax.random.split(key, 5)
    # nn.Embedding default: N(0, 1)
    emb_table = jax.random.normal(k_emb, (vocab_size, n_dim), dtype=jnp.float32)
    # nn.Linear default: U(-1/sqrt(fan_in), 1/sqrt(fan_in)); stored transposed (in, out)
    fan1 = context_size * n_dim
    lim1 = 1.0 / jnp.sqrt(fan1)
    w1_t = jax.random.uniform(k_w1, (fan1, hidden), jnp.float32, -lim1, lim1)
    b1 = jax.random.uniform(k_b1, (hidden,), jnp.float32, -lim1, lim1)
    lim2 = 1.0 / jnp.sqrt(hidden)
    w2_t = jax.random.uniform(k_w2, (hidden, vocab_size), jnp.float32, -lim2, lim2)
    b2 = jax.random.uniform(k_b2, (vocab_size,), jnp.float32, -lim2, lim2)
    return emb_table, w1_t, b1, w2_t, b2


def ref_forward_batched(x_idx, emb_table, w1_t, b1, w2_t, b2):
    b_size = x_idx.shape[0]
    emb = jnp.take(emb_table, x_idx.reshape(-1), axis=0).reshape(b_size, -1)
    h = jnp.maximum(emb @ w1_t + b1, 0.0)
    logits = h @ w2_t + b2
    return jax.nn.log_softmax(logits, axis=-1)


if __name__ == "__main__":
    vocb = set(test_sentence)
    word_to_idx = {w: i for i, w in enumerate(sorted(vocb))}
    vocab_size = len(word_to_idx)

    key = jax.random.PRNGKey(0)
    params = make_params(vocab_size, CONTEXT_SIZE, N_DIM, HIDDEN, key)

    # All n-gram contexts of the sonnet: (B, CONTEXT_SIZE) int32, B = 113.
    contexts = [
        [word_to_idx[test_sentence[i + j]] for j in range(CONTEXT_SIZE)]
        for i in range(len(test_sentence) - CONTEXT_SIZE)
    ]
    x_idx = jnp.array(contexts, dtype=jnp.int32)

    log_prob = jax.block_until_ready(ngram_forward_batched(x_idx, *params))
    ref = ref_forward_batched(x_idx, *params)

    assert log_prob.shape == (x_idx.shape[0], vocab_size)
    assert bool(jnp.all(jnp.isfinite(log_prob)))
    assert jnp.allclose(log_prob, ref, atol=1e-4, rtol=1e-4)

    # Single-context call (exact PyTorch-module signature: (1, vocab) log-probs).
    single = jax.block_until_ready(ngram_forward(x_idx[0], *params))
    assert single.shape == (1, vocab_size)
    assert jnp.allclose(single, ref[0:1], atol=1e-4, rtol=1e-4)

    print("KERNEL_OK")
</pallas_src>

<mosaic_0001>
module attributes {stable_mosaic.version = 11 : i64} {
  func.func @ngram_kernel(%arg0: i32, %arg1: memref<128x2xi32, #tpu.memory_space<vmem>>, %arg2: memref<256x128xf32, #tpu.memory_space<vmem>>, %arg3: memref<1x128xf32, #tpu.memory_space<vmem>>, %arg4: memref<128x128xf32, #tpu.memory_space<vmem>>, %arg5: memref<1x128xf32, #tpu.memory_space<vmem>>, %arg6: memref<128x128xf32, #tpu.memory_space<vmem>>) attributes {dimension_semantics = [#tpu.dimension_semantics<parallel>], iteration_bounds = array<i64: 1>, scalar_prefetch = 0 : i64, scratch_operands = 0 : i64, tpu.core_type = #tpu.core_type<tc>, window_params = [{transform_indices = @transform_0, window_bounds = array<i64: 128, 2>}, {pipeline_mode = #tpu.pipeline_mode<synchronous>, transform_indices = @transform_1, window_bounds = array<i64: 256, 128>}, {pipeline_mode = #tpu.pipeline_mode<synchronous>, transform_indices = @transform_2, window_bounds = array<i64: 1, 128>}, {pipeline_mode = #tpu.pipeline_mode<synchronous>, transform_indices = @transform_3, window_bounds = array<i64: 128, 128>}, {pipeline_mode = #tpu.pipeline_mode<synchronous>, transform_indices = @transform_4, window_bounds = array<i64: 1, 128>}, {transform_indices = @transform_5, window_bounds = array<i64: 128, 128>}]} {
    %c0 = arith.constant 0 : index
    %c0_0 = arith.constant 0 : index
    %0 = vector.load %arg1[%c0, %c0_0] : memref<128x2xi32, #tpu.memory_space<vmem>>, vector<128x2xi32>
    %1 = tpu.iota {dimensions = array<i32: 1>} : vector<128x256xi32>
    %2 = vector.extract_strided_slice %0 {offsets = [0, 0], sizes = [128, 1], strides = [1, 1]} : vector<128x2xi32> to vector<128x1xi32>
    %3 = vector.broadcast %2 : vector<128x1xi32> to vector<128x256xi32>
    %4 = arith.cmpi eq, %1, %3 : vector<128x256xi32>
    %5 = vector.extract_strided_slice %0 {offsets = [0, 1], sizes = [128, 1], strides = [1, 1]} : vector<128x2xi32> to vector<128x1xi32>
    %c128_i32 = arith.constant 128 : i32
    %6 = vector.broadcast %c128_i32 : i32 to vector<128x1xi32>
    %7 = arith.addi %5, %6 : vector<128x1xi32>
    %8 = vector.broadcast %7 : vector<128x1xi32> to vector<128x256xi32>
    %9 = arith.cmpi eq, %1, %8 : vector<128x256xi32>
    %10 = arith.ori %4, %9 : vector<128x256xi1>
    %11 = arith.extui %10 : vector<128x256xi1> to vector<128x256xi32>
    %12 = arith.sitofp %11 : vector<128x256xi32> to vector<128x256xf32>
    %c0_1 = arith.constant 0 : index
    %c0_2 = arith.constant 0 : index
    %13 = vector.load %arg2[%c0_1, %c0_2] : memref<256x128xf32, #tpu.memory_space<vmem>>, vector<256x128xf32>
    %cst = arith.constant dense<0.000000e+00> : vector<128x128xf32>
    %14 = tpu.matmul %12, %13, %cst {dimension_numbers = #tpu.dot_dimension_numbers<[1], [0], [0], [1], [0, 0, 1, 1], [], []>} : vector<128x256xf32>, vector<256x128xf32>, vector<128x128xf32> -> vector<128x128xf32>
    %c0_3 = arith.constant 0 : index
    %c0_4 = arith.constant 0 : index
    %15 = vector.load %arg3[%c0_3, %c0_4] : memref<1x128xf32, #tpu.memory_space<vmem>>, vector<1x128xf32>
    %16 = vector.broadcast %15 : vector<1x128xf32> to vector<128x128xf32>
    %17 = arith.addf %14, %16 : vector<128x128xf32>
    %cst_5 = arith.constant 0.000000e+00 : f32
    %18 = vector.broadcast %cst_5 : f32 to vector<128x128xf32>
    %19 = arith.maximumf %17, %18 : vector<128x128xf32>
    %c0_6 = arith.constant 0 : index
    %c0_7 = arith.constant 0 : index
    %20 = vector.load %arg4[%c0_6, %c0_7] : memref<128x128xf32, #tpu.memory_space<vmem>>, vector<128x128xf32>
    %cst_8 = arith.constant dense<0.000000e+00> : vector<128x128xf32>
    %21 = tpu.matmul %19, %20, %cst_8 {dimension_numbers = #tpu.dot_dimension_numbers<[1], [0], [0], [1], [0, 0, 1, 1], [], []>} : vector<128x128xf32>, vector<128x128xf32>, vector<128x128xf32> -> vector<128x128xf32>
    %c0_9 = arith.constant 0 : index
    %c0_10 = arith.constant 0 : index
    %22 = vector.load %arg5[%c0_9, %c0_10] : memref<1x128xf32, #tpu.memory_space<vmem>>, vector<1x128xf32>
    %23 = vector.broadcast %22 : vector<1x128xf32> to vector<128x128xf32>
    %24 = arith.addf %21, %23 : vector<128x128xf32>
    %cst_11 = arith.constant dense<0xFF800000> : vector<128xf32>
    %25 = vector.multi_reduction <maximumf>, %24, %cst_11 [1] : vector<128x128xf32> to vector<128xf32>
    %26 = vector.shape_cast %25 : vector<128xf32> to vector<128x1xf32>
    %27 = vector.broadcast %26 : vector<128x1xf32> to vector<128x128xf32>
    %28 = arith.subf %24, %27 : vector<128x128xf32>
    %29 = math.exp %28 : vector<128x128xf32>
    %cst_12 = arith.constant dense<0.000000e+00> : vector<128xf32>
    %30 = vector.multi_reduction <add>, %29, %cst_12 [1] : vector<128x128xf32> to vector<128xf32>
    %31 = vector.shape_cast %30 : vector<128xf32> to vector<128x1xf32>
    %32 = math.log %31 : vector<128x1xf32>
    %33 = vector.broadcast %32 : vector<128x1xf32> to vector<128x128xf32>
    %34 = arith.subf %28, %33 : vector<128x128xf32>
    %c0_13 = arith.constant 0 : index
    %c0_14 = arith.constant 0 : index
    %35 = vector.load %arg6[%c0_13, %c0_14] : memref<128x128xf32, #tpu.memory_space<vmem>>, vector<128x128xf32>
    tpu.vector_store %arg6[%c0_13, %c0_14], %34 {strides = array<i32>} : memref<128x128xf32, #tpu.memory_space<vmem>>, vector<128x128xf32>,
    return
  }
  func.func @transform_0(%arg0: i32) -> (i32, i32) {
    %c0_i32 = arith.constant 0 : i32
    %c0_i32_0 = arith.constant 0 : i32
    return %arg0, %c0_i32 : i32, i32
  }
  func.func @transform_1(%arg0: i32) -> (i32, i32) {
    %c0_i32 = arith.constant 0 : i32
    %c0_i32_0 = arith.constant 0 : i32
    %c0_i32_1 = arith.constant 0 : i32
    return %c0_i32, %c0_i32_0 : i32, i32
  }
  func.func @transform_2(%arg0: i32) -> (i32, i32) {
    %c0_i32 = arith.constant 0 : i32
    %c0_i32_0 = arith.constant 0 : i32
    %c0_i32_1 = arith.constant 0 : i32
    return %c0_i32, %c0_i32_0 : i32, i32
  }
  func.func @transform_3(%arg0: i32) -> (i32, i32) {
    %c0_i32 = arith.constant 0 : i32
    %c0_i32_0 = arith.constant 0 : i32
    %c0_i32_1 = arith.constant 0 : i32
    return %c0_i32, %c0_i32_0 : i32, i32
  }
  func.func @transform_4(%arg0: i32) -> (i32, i32) {
    %c0_i32 = arith.constant 0 : i32
    %c0_i32_0 = arith.constant 0 : i32
    %c0_i32_1 = arith.constant 0 : i32
    return %c0_i32, %c0_i32_0 : i32, i32
  }
  func.func @transform_5(%arg0: i32) -> (i32, i32) {
    %c0_i32 = arith.constant 0 : i32
    %c0_i32_0 = arith.constant 0 : i32
    return %arg0, %c0_i32 : i32, i32
  }
}

</mosaic_0001>

<llo_original>
// kernel: ngram_forward_batched.1
$region0: #{ngram_forward_batched.1}
  #allocation0 [shape = 'u32[]', space=smem, size = 0x4, offset = 0x4, fixed_abs, tag = 'smem constant byte address 0x4 - core index']
  #allocation1 [shape = 'u32[72,128]{1,0:T(1,128)}', space=vmem, size = 0x9000, scoped, tag = 'internal scratch']
  %s0 = inlined_call_operand.vmem [shape: s32[128,2], index: 0, kind: input, shape index: {}]
  %s1 = inlined_call_operand.vmem [shape: f32[256,128], index: 1, kind: input, shape index: {}]
  %s2 = inlined_call_operand.vmem [shape: f32[1,128], index: 2, kind: input, shape index: {}]
  %s3 = inlined_call_operand.vmem [shape: f32[128,128], index: 3, kind: input, shape index: {}]
  %s4 = inlined_call_operand.vmem [shape: f32[1,128], index: 4, kind: input, shape index: {}]
  %s5 = inlined_call_operand.vmem [shape: f32[128,128], index: 5, kind: output, shape index: {}]
  %s6 = sld [smem:[#allocation0]]
  $region30: #{ngram_forward_batched.1} parent=0
    _
  %s8 = ssub.s32 1, %s6
  %s9 = scalar_select 0, %s8, %s6
  // Predicated region
  $region2: #{ngram_forward_batched.1} parent=0 // pred_check
    _
  $region3: #{ngram_forward_batched.1} parent=0 // pred_check_branch
    %11 = sbr.rel (0) target = $region5
  $region4: #{ngram_forward_batched.1} parent=0 // pred_region
    _
  $region5: #{ngram_forward_batched.1} parent=0 // pred_fallthru
    _
  // Predicated region
  $region6: #{ngram_forward_batched.1} parent=0 // pred_check
    _
  $region7: #{ngram_forward_batched.1} parent=0 // pred_check_branch
    %13 = sbr.rel (0) target = $region9
  $region8: #{ngram_forward_batched.1} parent=0 // pred_region
    _
  $region9: #{ngram_forward_batched.1} parent=0 // pred_fallthru
    _
  // Predicated region
  $region10: #{ngram_forward_batched.1} parent=0 // pred_check
    _
  $region11: #{ngram_forward_batched.1} parent=0 // pred_check_branch
    %15 = sbr.rel (0) target = $region13
  $region12: #{ngram_forward_batched.1} parent=0 // pred_region
    _
  $region13: #{ngram_forward_batched.1} parent=0 // pred_fallthru
    _
  // Predicated region
  $region14: #{ngram_forward_batched.1} parent=0 // pred_check
    _
  $region15: #{ngram_forward_batched.1} parent=0 // pred_check_branch
    %17 = sbr.rel (0) target = $region17
  $region16: #{ngram_forward_batched.1} parent=0 // pred_region
    _
  $region17: #{ngram_forward_batched.1} parent=0 // pred_fallthru
    _
  // Predicated region
  $region18: #{ngram_forward_batched.1} parent=0 // pred_check
    _
  $region19: #{ngram_forward_batched.1} parent=0 // pred_check_branch
    %19 = sbr.rel (0) target = $region21
  $region20: #{ngram_forward_batched.1} parent=0 // pred_region
    _
  $region21: #{ngram_forward_batched.1} parent=0 // pred_fallthru
    _
  %v20 = vld [vmem:[%s0] sm:$0xff]
  %v21 = vld [vmem:[%s0 + $0x8] sm:$0xff]
  %v22 = vld [vmem:[%s0 + $0x10] sm:$0xff]
  %v23 = vld [vmem:[%s0 + $0x18] sm:$0xff]
  %v24 = vld [vmem:[%s0 + $0x20] sm:$0xff]
  %v25 = vld [vmem:[%s0 + $0x28] sm:$0xff]
  %v26 = vld [vmem:[%s0 + $0x30] sm:$0xff]
  %v27 = vld [vmem:[%s0 + $0x38] sm:$0xff]
  %v28 = vld [vmem:[%s0 + $0x40] sm:$0xff]
  %v29 = vld [vmem:[%s0 + $0x48] sm:$0xff]
  %v30 = vld [vmem:[%s0 + $0x50] sm:$0xff]
  %v31 = vld [vmem:[%s0 + $0x58] sm:$0xff]
  %v32 = vld [vmem:[%s0 + $0x60] sm:$0xff]
  %v33 = vld [vmem:[%s0 + $0x68] sm:$0xff]
  %v34 = vld [vmem:[%s0 + $0x70] sm:$0xff]
  %v35 = vld [vmem:[%s0 + $0x78] sm:$0xff]
  %v36 = vlaneseq
  %v37 = vand.u32 %v36, 127
  %v38 = vadd.s32 %v37, 128
  %39 = vset.pattern.permute.xlu0 0
  %40 = vperm.xlu0 %39, %v20
  %v41 = vpop.permute.xlu0 %40
  %42 = vset.pattern.permute.xlu0 0
  %43 = vperm.xlu0 %42, %v21
  %v44 = vpop.permute.xlu0 %43
  %45 = vset.pattern.permute.xlu0 0
  %46 = vperm.xlu0 %45, %v22
  %v47 = vpop.permute.xlu0 %46
  %48 = vset.pattern.permute.xlu0 0
  %49 = vperm.xlu0 %48, %v23
  %v50 = vpop.permute.xlu0 %49
  %51 = vset.pattern.permute.xlu0 0
  %52 = vperm.xlu0 %51, %v24
  %v53 = vpop.permute.xlu0 %52
  %54 = vset.pattern.permute.xlu0 0
  %55 = vperm.xlu0 %54, %v25
  %v56 = vpop.permute.xlu0 %55
  %57 = vset.pattern.permute.xlu0 0
  %58 = vperm.xlu0 %57, %v26
  %v59 = vpop.permute.xlu0 %58
  %60 = vset.pattern.permute.xlu0 0
  %61 = vperm.xlu0 %60, %v27
  %v62 = vpop.permute.xlu0 %61
  %63 = vset.pattern.permute.xlu0 0
  %64 = vperm.xlu0 %63, %v28
  %v65 = vpop.permute.xlu0 %64
  %66 = vset.pattern.permute.xlu0 0
  %67 = vperm.xlu0 %66, %v29
  %v68 = vpop.permute.xlu0 %67
  %69 = vset.pattern.permute.xlu0 0
  %70 = vperm.xlu0 %69, %v30
  %v71 = vpop.permute.xlu0 %70
  %72 = vset.pattern.permute.xlu0 0
  %73 = vperm.xlu0 %72, %v31
  %v74 = vpop.permute.xlu0 %73
  %75 = vset.pattern.permute.xlu0 0
  %76 = vperm.xlu0 %75, %v32
  %v77 = vpop.permute.xlu0 %76
  %78 = vset.pattern.permute.xlu0 0
  %79 = vperm.xlu0 %78, %v33
  %v80 = vpop.permute.xlu0 %79
  %81 = vset.pattern.permute.xlu0 0
  %82 = vperm.xlu0 %81, %v34
  %v83 = vpop.permute.xlu0 %82
  %84 = vset.pattern.permute.xlu0 0
  %85 = vperm.xlu0 %84, %v35
  %v86 = vpop.permute.xlu0 %85
  %vm87 = vcmp.eq.s32.totalorder %v37, %v41
  %vm88 = vcmp.eq.s32.totalorder %v38, %v41
  %vm89 = vcmp.eq.s32.totalorder %v37, %v44
  %vm90 = vcmp.eq.s32.totalorder %v38, %v44
  %vm91 = vcmp.eq.s32.totalorder %v37, %v47
  %vm92 = vcmp.eq.s32.totalorder %v38, %v47
  %vm93 = vcmp.eq.s32.totalorder %v37, %v50
  %vm94 = vcmp.eq.s32.totalorder %v38, %v50
  %vm95 = vcmp.eq.s32.totalorder %v37, %v53
  %vm96 = vcmp.eq.s32.totalorder %v38, %v53
  %vm97 = vcmp.eq.s32.totalorder %v37, %v56
  %vm98 = vcmp.eq.s32.totalorder %v38, %v56
  %vm99 = vcmp.eq.s32.totalorder %v37, %v59
  %vm100 = vcmp.eq.s32.totalorder %v38, %v59
  %vm101 = vcmp.eq.s32.totalorder %v37, %v62
  %vm102 = vcmp.eq.s32.totalorder %v38, %v62
  %vm103 = vcmp.eq.s32.totalorder %v37, %v65
  %vm104 = vcmp.eq.s32.totalorder %v38, %v65
  %vm105 = vcmp.eq.s32.totalorder %v37, %v68
  %vm106 = vcmp.eq.s32.totalorder %v38, %v68
  %vm107 = vcmp.eq.s32.totalorder %v37, %v71
  %vm108 = vcmp.eq.s32.totalorder %v38, %v71
  %vm109 = vcmp.eq.s32.totalorder %v37, %v74
  %vm110 = vcmp.eq.s32.totalorder %v38, %v74
  %vm111 = vcmp.eq.s32.totalorder %v37, %v77
  %vm112 = vcmp.eq.s32.totalorder %v38, %v77
  %vm113 = vcmp.eq.s32.totalorder %v37, %v80
  %vm114 = vcmp.eq.s32.totalorder %v38, %v80
  %vm115 = vcmp.eq.s32.totalorder %v37, %v83
  %vm116 = vcmp.eq.s32.totalorder %v38, %v83
  %vm117 = vcmp.eq.s32.totalorder %v37, %v86
  %vm118 = vcmp.eq.s32.totalorder %v38, %v86
  %v119 = vadd.s32 %v20, 128
  %v120 = vadd.s32 %v21, 128
  %v121 = vadd.s32 %v22, 128
  %v122 = vadd.s32 %v23, 128
  %v123 = vadd.s32 %v24, 128
  %v124 = vadd.s32 %v25, 128
  %v125 = vadd.s32 %v26, 128
  %v126 = vadd.s32 %v27, 128
  %v127 = vadd.s32 %v28, 128
  %v128 = vadd.s32 %v29, 128
  %v129 = vadd.s32 %v30, 128
  %v130 = vadd.s32 %v31, 128
  %v131 = vadd.s32 %v32, 128
  %v132 = vadd.s32 %v33, 128
  %v133 = vadd.s32 %v34, 128
  %v134 = vadd.s32 %v35, 128
  %135 = vset.pattern.permute.xlu0 1
  %136 = vperm.xlu0 %135, %v119
  %v137 = vpop.permute.xlu0 %136
  %138 = vset.pattern.permute.xlu0 1
  %139 = vperm.xlu0 %138, %v120
  %v140 = vpop.permute.xlu0 %139
  %141 = vset.pattern.permute.xlu0 1
  %142 = vperm.xlu0 %141, %v121
  %v143 = vpop.permute.xlu0 %142
  %144 = vset.pattern.permute.xlu0 1
  %145 = vperm.xlu0 %144, %v122
  %v146 = vpop.permute.xlu0 %145
  %147 = vset.pattern.permute.xlu0 1
  %148 = vperm.xlu0 %147, %v123
  %v149 = vpop.permute.xlu0 %148
  %150 = vset.pattern.permute.xlu0 1
  %151 = vperm.xlu0 %150, %v124
  %v152 = vpop.permute.xlu0 %151
  %153 = vset.pattern.permute.xlu0 1
  %154 = vperm.xlu0 %153, %v125
  %v155 = vpop.permute.xlu0 %154
  %156 = vset.pattern.permute.xlu0 1
  %157 = vperm.xlu0 %156, %v126
  %v158 = vpop.permute.xlu0 %157
  %159 = vset.pattern.permute.xlu0 1
  %160 = vperm.xlu0 %159, %v127
  %v161 = vpop.permute.xlu0 %160
  %162 = vset.pattern.permute.xlu0 1
  %163 = vperm.xlu0 %162, %v128
  %v164 = vpop.permute.xlu0 %163
  %165 = vset.pattern.permute.xlu0 1
  %166 = vperm.xlu0 %165, %v129
  %v167 = vpop.permute.xlu0 %166
  %168 = vset.pattern.permute.xlu0 1
  %169 = vperm.xlu0 %168, %v130
  %v170 = vpop.permute.xlu0 %169
  %171 = vset.pattern.permute.xlu0 1
  %172 = vperm.xlu0 %171, %v131
  %v173 = vpop.permute.xlu0 %172
  %174 = vset.pattern.permute.xlu0 1
  %175 = vperm.xlu0 %174, %v132
  %v176 = vpop.permute.xlu0 %175
  %177 = vset.pattern.permute.xlu0 1
  %178 = vperm.xlu0 %177, %v133
  %v179 = vpop.permute.xlu0 %178
  %180 = vset.pattern.permute.xlu0 1
  %181 = vperm.xlu0 %180, %v134
  %v182 = vpop.permute.xlu0 %181
  %vm183 = vcmp.eq.s32.totalorder %v37, %v137
  %vm184 = vcmp.eq.s32.totalorder %v38, %v137
  %vm185 = vcmp.eq.s32.totalorder %v37, %v140
  %vm186 = vcmp.eq.s32.totalorder %v38, %v140
  %vm187 = vcmp.eq.s32.totalorder %v37, %v143
  %vm188 = vcmp.eq.s32.totalorder %v38, %v143
  %vm189 = vcmp.eq.s32.totalorder %v37, %v146
  %vm190 = vcmp.eq.s32.totalorder %v38, %v146
  %vm191 = vcmp.eq.s32.totalorder %v37, %v149
  %vm192 = vcmp.eq.s32.totalorder %v38, %v149
  %vm193 = vcmp.eq.s32.totalorder %v37, %v152
  %vm194 = vcmp.eq.s32.totalorder %v38, %v152
  %vm195 = vcmp.eq.s32.totalorder %v37, %v155
  %vm196 = vcmp.eq.s32.totalorder %v38, %v155
  %vm197 = vcmp.eq.s32.totalorder %v37, %v158
  %vm198 = vcmp.eq.s32.totalorder %v38, %v158
  %vm199 = vcmp.eq.s32.totalorder %v37, %v161
  %vm200 = vcmp.eq.s32.totalorder %v38, %v161
  %vm201 = vcmp.eq.s32.totalorder %v37, %v164
  %vm202 = vcmp.eq.s32.totalorder %v38, %v164
  %vm203 = vcmp.eq.s32.totalorder %v37, %v167
  %vm204 = vcmp.eq.s32.totalorder %v38, %v167
  %vm205 = vcmp.eq.s32.totalorder %v37, %v170
  %vm206 = vcmp.eq.s32.totalorder %v38, %v170
  %vm207 = vcmp.eq.s32.totalorder %v37, %v173
  %vm208 = vcmp.eq.s32.totalorder %v38, %v173
  %vm209 = vcmp.eq.s32.totalorder %v37, %v176
  %vm210 = vcmp.eq.s32.totalorder %v38, %v176
  %vm211 = vcmp.eq.s32.totalorder %v37, %v179
  %vm212 = vcmp.eq.s32.totalorder %v38, %v179
  %vm213 = vcmp.eq.s32.totalorder %v37, %v182
  %vm214 = vcmp.eq.s32.totalorder %v38, %v182
  %vm215 = vmor %vm87, %vm183
  %vm216 = vmor %vm88, %vm184
  %vm217 = vmor %vm89, %vm185
  %vm218 = vmor %vm90, %vm186
  %vm219 = vmor %vm91, %vm187
  %vm220 = vmor %vm92, %vm188
  %vm221 = vmor %vm93, %vm189
  %vm222 = vmor %vm94, %vm190
  %vm223 = vmor %vm95, %vm191
  %vm224 = vmor %vm96, %vm192
  %vm225 = vmor %vm97, %vm193
  %vm226 = vmor %vm98, %vm194
  %vm227 = vmor %vm99, %vm195
  %vm228 = vmor %vm100, %vm196
  %vm229 = vmor %vm101, %vm197
  %vm230 = vmor %vm102, %vm198
  %vm231 = vmor %vm103, %vm199
  %vm232 = vmor %vm104, %vm200
  %vm233 = vmor %vm105, %vm201
  %vm234 = vmor %vm106, %vm202
  %vm235 = vmor %vm107, %vm203
  %vm236 = vmor %vm108, %vm204
  %vm237 = vmor %vm109, %vm205
  %vm238 = vmor %vm110, %vm206
  %vm239 = vmor %vm111, %vm207
  %vm240 = vmor %vm112, %vm208
  %vm241 = vmor %vm113, %vm209
  %vm242 = vmor %vm114, %vm210
  %vm243 = vmor %vm115, %vm211
  %vm244 = vmor %vm116, %vm212
  %vm245 = vmor %vm117, %vm213
  %vm246 = vmor %vm118, %vm214
  %v247 = vsel %vm215, 1, 0
  %v248 = vsel %vm216, 1, 0
  %v249 = vsel %vm217, 1, 0
  %v250 = vsel %vm218, 1, 0
  %v251 = vsel %vm219, 1, 0
  %v252 = vsel %vm220, 1, 0
  %v253 = vsel %vm221, 1, 0
  %v254 = vsel %vm222, 1, 0
  %v255 = vsel %vm223, 1, 0
  %v256 = vsel %vm224, 1, 0
  %v257 = vsel %vm225, 1, 0
  %v258 = vsel %vm226, 1, 0
  %v259 = vsel %vm227, 1, 0
  %v260 = vsel %vm228, 1, 0
  %v261 = vsel %vm229, 1, 0
  %v262 = vsel %vm230, 1, 0
  %v263 = vsel %vm231, 1, 0
  %v264 = vsel %vm232, 1, 0
  %v265 = vsel %vm233, 1, 0
  %v266 = vsel %vm234, 1, 0
  %v267 = vsel %vm235, 1, 0
  %v268 = vsel %vm236, 1, 0
  %v269 = vsel %vm237, 1, 0
  %v270 = vsel %vm238, 1, 0
  %v271 = vsel %vm239, 1, 0
  %v272 = vsel %vm240, 1, 0
  %v273 = vsel %vm241, 1, 0
  %v274 = vsel %vm242, 1, 0
  %v275 = vsel %vm243, 1, 0
  %v276 = vsel %vm244, 1, 0
  %v277 = vsel %vm245, 1, 0
  %v278 = vsel %vm246, 1, 0
  %v279 = vcvt.s32.f32 %v247
  %v280 = vcvt.s32.f32 %v248
  %v281 = vcvt.s32.f32 %v249
  %v282 = vcvt.s32.f32 %v250
  %v283 = vcvt.s32.f32 %v251
  %v284 = vcvt.s32.f32 %v252
  %v285 = vcvt.s32.f32 %v253
  %v286 = vcvt.s32.f32 %v254
  %v287 = vcvt.s32.f32 %v255
  %v288 = vcvt.s32.f32 %v256
  %v289 = vcvt.s32.f32 %v257
  %v290 = vcvt.s32.f32 %v258
  %v291 = vcvt.s32.f32 %v259
  %v292 = vcvt.s32.f32 %v260
  %v293 = vcvt.s32.f32 %v261
  %v294 = vcvt.s32.f32 %v262
  %v295 = vcvt.s32.f32 %v263
  %v296 = vcvt.s32.f32 %v264
  %v297 = vcvt.s32.f32 %v265
  %v298 = vcvt.s32.f32 %v266
  %v299 = vcvt.s32.f32 %v267
  %v300 = vcvt.s32.f32 %v268
  %v301 = vcvt.s32.f32 %v269
  %v302 = vcvt.s32.f32 %v270
  %v303 = vcvt.s32.f32 %v271
  %v304 = vcvt.s32.f32 %v272
  %v305 = vcvt.s32.f32 %v273
  %v306 = vcvt.s32.f32 %v274
  %v307 = vcvt.s32.f32 %v275
  %v308 = vcvt.s32.f32 %v276
  %v309 = vcvt.s32.f32 %v277
  %v310 = vcvt.s32.f32 %v278
  %v311 = vld [vmem:[%s1] sm:$0xff]
  %v312 = vld [vmem:[%s1 + $0x8] sm:$0xff]
  %v313 = vld [vmem:[%s1 + $0x10] sm:$0xff]
  %v314 = vld [vmem:[%s1 + $0x18] sm:$0xff]
  %v315 = vld [vmem:[%s1 + $0x20] sm:$0xff]
  %v316 = vld [vmem:[%s1 + $0x28] sm:$0xff]
  %v317 = vld [vmem:[%s1 + $0x30] sm:$0xff]
  %v318 = vld [vmem:[%s1 + $0x38] sm:$0xff]
  %v319 = vld [vmem:[%s1 + $0x40] sm:$0xff]
  %v320 = vld [vmem:[%s1 + $0x48] sm:$0xff]
  %v321 = vld [vmem:[%s1 + $0x50] sm:$0xff]
  %v322 = vld [vmem:[%s1 + $0x58] sm:$0xff]
  %v323 = vld [vmem:[%s1 + $0x60] sm:$0xff]
  %v324 = vld [vmem:[%s1 + $0x68] sm:$0xff]
  %v325 = vld [vmem:[%s1 + $0x70] sm:$0xff]
  %v326 = vld [vmem:[%s1 + $0x78] sm:$0xff]
  %v327 = vld [vmem:[%s1 + $0x80] sm:$0xff]
  %v328 = vld [vmem:[%s1 + $0x88] sm:$0xff]
  %v329 = vld [vmem:[%s1 + $0x90] sm:$0xff]
  %v330 = vld [vmem:[%s1 + $0x98] sm:$0xff]
  %v331 = vld [vmem:[%s1 + $0xa0] sm:$0xff]
  %v332 = vld [vmem:[%s1 + $0xa8] sm:$0xff]
  %v333 = vld [vmem:[%s1 + $0xb0] sm:$0xff]
  %v334 = vld [vmem:[%s1 + $0xb8] sm:$0xff]
  %v335 = vld [vmem:[%s1 + $0xc0] sm:$0xff]
  %v336 = vld [vmem:[%s1 + $0xc8] sm:$0xff]
  %v337 = vld [vmem:[%s1 + $0xd0] sm:$0xff]
  %v338 = vld [vmem:[%s1 + $0xd8] sm:$0xff]
  %v339 = vld [vmem:[%s1 + $0xe0] sm:$0xff]
  %v340 = vld [vmem:[%s1 + $0xe8] sm:$0xff]
  %v341 = vld [vmem:[%s1 + $0xf0] sm:$0xff]
  %v342 = vld [vmem:[%s1 + $0xf8] sm:$0xff]
  %v343 = vld [vmem:[%s2] sm:$0x1]
  %v345 = vperm.slane %v343, 0
  %347 = vmatpush.msra.mxu0 %v326
  %348 = vmatpush.msra.mxu0 %v325
  %349 = vmatpush.msra.mxu0 %v324
  %350 = vmatpush.msra.mxu0 %v323
  %351 = vmatpush.msra.mxu0 %v322
  %352 = vmatpush.msra.mxu0 %v321
  %353 = vmatpush.msra.mxu0 %v320
  %354 = vmatpush.msra.mxu0 %v319
  %355 = vmatpush.msra.mxu0 %v318
  %356 = vmatpush.msra.mxu0 %v317
  %357 = vmatpush.msra.mxu0 %v316
  %358 = vmatpush.msra.mxu0 %v315
  %359 = vmatpush.msra.mxu0 %v314
  %360 = vmatpush.msra.mxu0 %v313
  %361 = vmatpush.msra.mxu0 %v312
  %362 = vmatpush.msra.mxu0 %v311
  %363 = vmatmul.f32.gmra.mxu0 %v279
  %v364 = vpop.f32.mrf.mxu0
  %v365 = vadd.f32 %v345, %v364
  %366 = vmatmul.f32.gmra.mxu0 %v281
  %v367 = vpop.f32.mrf.mxu0
  %v368 = vadd.f32 %v345, %v367
  %369 = vmatmul.f32.gmra.mxu0 %v283
  %v370 = vpop.f32.mrf.mxu0
  %v371 = vadd.f32 %v345, %v370
  %372 = vmatmul.f32.gmra.mxu0 %v285
  %v373 = vpop.f32.mrf.mxu0
  %v374 = vadd.f32 %v345, %v373
  %375 = vmatmul.f32.gmra.mxu0 %v287
  %v376 = vpop.f32.mrf.mxu0
  %v377 = vadd.f32 %v345, %v376
  %378 = vmatmul.f32.gmra.mxu0 %v289
  %v379 = vpop.f32.mrf.mxu0
  %v380 = vadd.f32 %v345, %v379
  %381 = vmatmul.f32.gmra.mxu0 %v291
  %v382 = vpop.f32.mrf.mxu0
  %v383 = vadd.f32 %v345, %v382
  %384 = vmatmul.f32.gmra.mxu0 %v293
  %v385 = vpop.f32.mrf.mxu0
  %v386 = vadd.f32 %v345, %v385
  %387 = vmatmul.f32.gmra.mxu0 %v295
  %v388 = vpop.f32.mrf.mxu0
  %v389 = vadd.f32 %v345, %v388
  %390 = vmatmul.f32.gmra.mxu0 %v297
  %v391 = vpop.f32.mrf.mxu0
  %v392 = vadd.f32 %v345, %v391
  %393 = vmatmul.f32.gmra.mxu0 %v299
  %v394 = vpop.f32.mrf.mxu0
  %v395 = vadd.f32 %v345, %v394
  %396 = vmatmul.f32.gmra.mxu0 %v301
  %v397 = vpop.f32.mrf.mxu0
  %v398 = vadd.f32 %v345, %v397
  %399 = vmatmul.f32.gmra.mxu0 %v303
  %v400 = vpop.f32.mrf.mxu0
  %v401 = vadd.f32 %v345, %v400
  %402 = vmatmul.f32.gmra.mxu0 %v305
  %v403 = vpop.f32.mrf.mxu0
  %v404 = vadd.f32 %v345, %v403
  %405 = vmatmul.f32.gmra.mxu0 %v307
  %v406 = vpop.f32.mrf.mxu0
  %v407 = vadd.f32 %v345, %v406
  %408 = vmatmul.f32.gmra.mxu0 %v309
  %v409 = vpop.f32.mrf.mxu0
  %v410 = vadd.f32 %v345, %v409
  %411 = vdwg.mxu0
  %412 = vmatpush.msra.mxu0 %v342
  %413 = vmatpush.msra.mxu0 %v341
  %414 = vmatpush.msra.mxu0 %v340
  %415 = vmatpush.msra.mxu0 %v339
  %416 = vmatpush.msra.mxu0 %v338
  %417 = vmatpush.msra.mxu0 %v337
  %418 = vmatpush.msra.mxu0 %v336
  %419 = vmatpush.msra.mxu0 %v335
  %420 = vmatpush.msra.mxu0 %v334
  %421 = vmatpush.msra.mxu0 %v333
  %422 = vmatpush.msra.mxu0 %v332
  %423 = vmatpush.msra.mxu0 %v331
  %424 = vmatpush.msra.mxu0 %v330
  %425 = vmatpush.msra.mxu0 %v329
  %426 = vmatpush.msra.mxu0 %v328
  %427 = vmatpush.msra.mxu0 %v327
  %428 = vmatmul.f32.gmra.mxu0 %v280
  %v429 = vpop.f32.mrf.mxu0
  %v430 = vadd.f32 %v365, %v429
  %431 = vmatmul.f32.gmra.mxu0 %v282
  %v432 = vpop.f32.mrf.mxu0
  %v433 = vadd.f32 %v368, %v432
  %434 = vmatmul.f32.gmra.mxu0 %v284
  %v435 = vpop.f32.mrf.mxu0
  %v436 = vadd.f32 %v371, %v435
  %437 = vmatmul.f32.gmra.mxu0 %v286
  %v438 = vpop.f32.mrf.mxu0
  %v439 = vadd.f32 %v374, %v438
  %440 = vmatmul.f32.gmra.mxu0 %v288
  %v441 = vpop.f32.mrf.mxu0
  %v442 = vadd.f32 %v377, %v441
  %443 = vmatmul.f32.gmra.mxu0 %v290
  %v444 = vpop.f32.mrf.mxu0
  %v445 = vadd.f32 %v380, %v444
  %446 = vmatmul.f32.gmra.mxu0 %v292
  %v447 = vpop.f32.mrf.mxu0
  %v448 = vadd.f32 %v383, %v447
  %449 = vmatmul.f32.gmra.mxu0 %v294
  %v450 = vpop.f32.mrf.mxu0
  %v451 = vadd.f32 %v386, %v450
  %452 = vmatmul.f32.gmra.mxu0 %v296
  %v453 = vpop.f32.mrf.mxu0
  %v454 = vadd.f32 %v389, %v453
  %455 = vmatmul.f32.gmra.mxu0 %v298
  %v456 = vpop.f32.mrf.mxu0
  %v457 = vadd.f32 %v392, %v456
  %458 = vmatmul.f32.gmra.mxu0 %v300
  %v459 = vpop.f32.mrf.mxu0
  %v460 = vadd.f32 %v395, %v459
  %461 = vmatmul.f32.gmra.mxu0 %v302
  %v462 = vpop.f32.mrf.mxu0
  %v463 = vadd.f32 %v398, %v462
  %464 = vmatmul.f32.gmra.mxu0 %v304
  %v465 = vpop.f32.mrf.mxu0
  %v466 = vadd.f32 %v401, %v465
  %467 = vmatmul.f32.gmra.mxu0 %v306
  %v468 = vpop.f32.mrf.mxu0
  %v469 = vadd.f32 %v404, %v468
  %470 = vmatmul.f32.gmra.mxu0 %v308
  %v471 = vpop.f32.mrf.mxu0
  %v472 = vadd.f32 %v407, %v471
  %473 = vmatmul.f32.gmra.mxu0 %v310
  %v474 = vpop.f32.mrf.mxu0
  %v475 = vadd.f32 %v410, %v474
  %476 = vdwg.mxu0
  %v477 = vmax.f32 %v430, 0.0
  %v478 = vmax.f32 %v433, 0.0
  %v479 = vmax.f32 %v436, 0.0
  %v480 = vmax.f32 %v439, 0.0
  %v481 = vmax.f32 %v442, 0.0
  %v482 = vmax.f32 %v445, 0.0
  %v483 = vmax.f32 %v448, 0.0
  %v484 = vmax.f32 %v451, 0.0
  %v485 = vmax.f32 %v454, 0.0
  %v486 = vmax.f32 %v457, 0.0
  %v487 = vmax.f32 %v460, 0.0
  %v488 = vmax.f32 %v463, 0.0
  %v489 = vmax.f32 %v466, 0.0
  %v490 = vmax.f32 %v469, 0.0
  %v491 = vmax.f32 %v472, 0.0
  %v492 = vmax.f32 %v475, 0.0
  %v493 = vld [vmem:[%s3] sm:$0xff]
  %v494 = vld [vmem:[%s3 + $0x8] sm:$0xff]
  %v495 = vld [vmem:[%s3 + $0x10] sm:$0xff]
  %v496 = vld [vmem:[%s3 + $0x18] sm:$0xff]
  %v497 = vld [vmem:[%s3 + $0x20] sm:$0xff]
  %v498 = vld [vmem:[%s3 + $0x28] sm:$0xff]
  %v499 = vld [vmem:[%s3 + $0x30] sm:$0xff]
  %v500 = vld [vmem:[%s3 + $0x38] sm:$0xff]
  %v501 = vld [vmem:[%s3 + $0x40] sm:$0xff]
  %v502 = vld [vmem:[%s3 + $0x48] sm:$0xff]
  %v503 = vld [vmem:[%s3 + $0x50] sm:$0xff]
  %v504 = vld [vmem:[%s3 + $0x58] sm:$0xff]
  %v505 = vld [vmem:[%s3 + $0x60] sm:$0xff]
  %v506 = vld [vmem:[%s3 + $0x68] sm:$0xff]
  %v507 = vld [vmem:[%s3 + $0x70] sm:$0xff]
  %v508 = vld [vmem:[%s3 + $0x78] sm:$0xff]
  %v509 = vld [vmem:[%s4] sm:$0x1]
  %v511 = vperm.slane %v509, 0
  %513 = vmatpush.msra.mxu0 %v508
  %514 = vmatpush.msra.mxu0 %v507
  %515 = vmatpush.msra.mxu0 %v506
  %516 = vmatpush.msra.mxu0 %v505
  %517 = vmatpush.msra.mxu0 %v504
  %518 = vmatpush.msra.mxu0 %v503
  %519 = vmatpush.msra.mxu0 %v502
  %520 = vmatpush.msra.mxu0 %v501
  %521 = vmatpush.msra.mxu0 %v500
  %522 = vmatpush.msra.mxu0 %v499
  %523 = vmatpush.msra.mxu0 %v498
  %524 = vmatpush.msra.mxu0 %v497
  %525 = vmatpush.msra.mxu0 %v496
  %526 = vmatpush.msra.mxu0 %v495
  %527 = vmatpush.msra.mxu0 %v494
  %528 = vmatpush.msra.mxu0 %v493
  %529 = vmatmul.f32.gmra.mxu0 %v477
  %v530 = vpop.f32.mrf.mxu0
  %v531 = vadd.f32 %v511, %v530
  %532 = vmatmul.f32.gmra.mxu0 %v478
  %v533 = vpop.f32.mrf.mxu0
  %v534 = vadd.f32 %v511, %v533
  %535 = vmatmul.f32.gmra.mxu0 %v479
  %v536 = vpop.f32.mrf.mxu0
  %v537 = vadd.f32 %v511, %v536
  %538 = vmatmul.f32.gmra.mxu0 %v480
  %v539 = vpop.f32.mrf.mxu0
  %v540 = vadd.f32 %v511, %v539
  %541 = vmatmul.f32.gmra.mxu0 %v481
  %v542 = vpop.f32.mrf.mxu0
  %v543 = vadd.f32 %v511, %v542
  %544 = vmatmul.f32.gmra.mxu0 %v482
  %v545 = vpop.f32.mrf.mxu0
  %v546 = vadd.f32 %v511, %v545
  %547 = vmatmul.f32.gmra.mxu0 %v483
  %v548 = vpop.f32.mrf.mxu0
  %v549 = vadd.f32 %v511, %v548
  %550 = vmatmul.f32.gmra.mxu0 %v484
  %v551 = vpop.f32.mrf.mxu0
  %v552 = vadd.f32 %v511, %v551
  %553 = vmatmul.f32.gmra.mxu0 %v485
  %v554 = vpop.f32.mrf.mxu0
  %v555 = vadd.f32 %v511, %v554
  %556 = vmatmul.f32.gmra.mxu0 %v486
  %v557 = vpop.f32.mrf.mxu0
  %v558 = vadd.f32 %v511, %v557
  %559 = vmatmul.f32.gmra.mxu0 %v487
  %v560 = vpop.f32.mrf.mxu0
  %v561 = vadd.f32 %v511, %v560
  %562 = vmatmul.f32.gmra.mxu0 %v488
  %v563 = vpop.f32.mrf.mxu0
  %v564 = vadd.f32 %v511, %v563
  %565 = vmatmul.f32.gmra.mxu0 %v489
  %v566 = vpop.f32.mrf.mxu0
  %v567 = vadd.f32 %v511, %v566
  %568 = vmatmul.f32.gmra.mxu0 %v490
  %v569 = vpop.f32.mrf.mxu0
  %v570 = vadd.f32 %v511, %v569
  %571 = vmatmul.f32.gmra.mxu0 %v491
  %v572 = vpop.f32.mrf.mxu0
  %v573 = vadd.f32 %v511, %v572
  %574 = vmatmul.f32.gmra.mxu0 %v492
  %v575 = vpop.f32.mrf.mxu0
  %v576 = vadd.f32 %v511, %v575
  %577 = vdwg.mxu0
  %578 = vmax.xlane.f32.xlu0 %v531
  %v579 = vpop.xlane.xlu0 %578
  %580 = vmax.xlane.f32.xlu0 %v534
  %v581 = vpop.xlane.xlu0 %580
  %582 = vmax.xlane.f32.xlu0 %v537
  %v583 = vpop.xlane.xlu0 %582
  %584 = vmax.xlane.f32.xlu0 %v540
  %v585 = vpop.xlane.xlu0 %584
  %586 = vmax.xlane.f32.xlu0 %v543
  %v587 = vpop.xlane.xlu0 %586
  %588 = vmax.xlane.f32.xlu0 %v546
  %v589 = vpop.xlane.xlu0 %588
  %590 = vmax.xlane.f32.xlu0 %v549
  %v591 = vpop.xlane.xlu0 %590
  %592 = vmax.xlane.f32.xlu0 %v552
  %v593 = vpop.xlane.xlu0 %592
  %594 = vmax.xlane.f32.xlu0 %v555
  %v595 = vpop.xlane.xlu0 %594
  %596 = vmax.xlane.f32.xlu0 %v558
  %v597 = vpop.xlane.xlu0 %596
  %598 = vmax.xlane.f32.xlu0 %v561
  %v599 = vpop.xlane.xlu0 %598
  %600 = vmax.xlane.f32.xlu0 %v564
  %v601 = vpop.xlane.xlu0 %600
  %602 = vmax.xlane.f32.xlu0 %v567
  %v603 = vpop.xlane.xlu0 %602
  %604 = vmax.xlane.f32.xlu0 %v570
  %v605 = vpop.xlane.xlu0 %604
  %606 = vmax.xlane.f32.xlu0 %v573
  %v607 = vpop.xlane.xlu0 %606
  %608 = vmax.xlane.f32.xlu0 %v576
  %v609 = vpop.xlane.xlu0 %608
  %v610 = vsub.f32 %v531, %v579
  %v611 = vsub.f32 %v534, %v581
  %v612 = vsub.f32 %v537, %v583
  %v613 = vsub.f32 %v540, %v585
  %v614 = vsub.f32 %v543, %v587
  %v615 = vsub.f32 %v546, %v589
  %v616 = vsub.f32 %v549, %v591
  %v617 = vsub.f32 %v552, %v593
  %v618 = vsub.f32 %v555, %v595
  %v619 = vsub.f32 %v558, %v597
  %v620 = vsub.f32 %v561, %v599
  %v621 = vsub.f32 %v564, %v601
  %v622 = vsub.f32 %v567, %v603
  %v623 = vsub.f32 %v570, %v605
  %v624 = vsub.f32 %v573, %v607
  %v625 = vsub.f32 %v576, %v609
  %v626 = vmul.f32 %v610, 1.442695
  %v627 = vpow.pop %v626
  %v628 = vmul.f32 %v611, 1.442695
  %v629 = vpow.pop %v628
  %v630 = vmul.f32 %v612, 1.442695
  %v631 = vpow.pop %v630
  %v632 = vmul.f32 %v613, 1.442695
  %v633 = vpow.pop %v632
  %v634 = vmul.f32 %v614, 1.442695
  %v635 = vpow.pop %v634
  %v636 = vmul.f32 %v615, 1.442695
  %v637 = vpow.pop %v636
  %v638 = vmul.f32 %v616, 1.442695
  %v639 = vpow.pop %v638
  %v640 = vmul.f32 %v617, 1.442695
  %v641 = vpow.pop %v640
  %v642 = vmul.f32 %v618, 1.442695
  %v643 = vpow.pop %v642
  %v644 = vmul.f32 %v619, 1.442695
  %v645 = vpow.pop %v644
  %v646 = vmul.f32 %v620, 1.442695
  %v647 = vpow.pop %v646
  %v648 = vmul.f32 %v621, 1.442695
  %v649 = vpow.pop %v648
  %v650 = vmul.f32 %v622, 1.442695
  %v651 = vpow.pop %v650
  %v652 = vmul.f32 %v623, 1.442695
  %v653 = vpow.pop %v652
  %v654 = vmul.f32 %v624, 1.442695
  %v655 = vpow.pop %v654
  %v656 = vmul.f32 %v625, 1.442695
  %v657 = vpow.pop %v656
  %658 = vadd.xlane.f32.xlu0 %v627
  %v659 = vpop.xlane.xlu0 %658
  %660 = vadd.xlane.f32.xlu0 %v629
  %v661 = vpop.xlane.xlu0 %660
  %662 = vadd.xlane.f32.xlu0 %v631
  %v663 = vpop.xlane.xlu0 %662
  %664 = vadd.xlane.f32.xlu0 %v633
  %v665 = vpop.xlane.xlu0 %664
  %666 = vadd.xlane.f32.xlu0 %v635
  %v667 = vpop.xlane.xlu0 %666
  %668 = vadd.xlane.f32.xlu0 %v637
  %v669 = vpop.xlane.xlu0 %668
  %670 = vadd.xlane.f32.xlu0 %v639
  %v671 = vpop.xlane.xlu0 %670
  %672 = vadd.xlane.f32.xlu0 %v641
  %v673 = vpop.xlane.xlu0 %672
  %674 = vadd.xlane.f32.xlu0 %v643
  %v675 = vpop.xlane.xlu0 %674
  %676 = vadd.xlane.f32.xlu0 %v645
  %v677 = vpop.xlane.xlu0 %676
  %678 = vadd.xlane.f32.xlu0 %v647
  %v679 = vpop.xlane.xlu0 %678
  %680 = vadd.xlane.f32.xlu0 %v649
  %v681 = vpop.xlane.xlu0 %680
  %682 = vadd.xlane.f32.xlu0 %v651
  %v683 = vpop.xlane.xlu0 %682
  %684 = vadd.xlane.f32.xlu0 %v653
  %v685 = vpop.xlane.xlu0 %684
  %686 = vadd.xlane.f32.xlu0 %v655
  %v687 = vpop.xlane.xlu0 %686
  %688 = vadd.xlane.f32.xlu0 %v657
  %v689 = vpop.xlane.xlu0 %688
  %v690 = vlog2.pop %v659
  %v691 = vmul.f32 %v690, 0.6931472
  %v692 = vlog2.pop %v661
  %v693 = vmul.f32 %v692, 0.6931472
  %v694 = vlog2.pop %v663
  %v695 = vmul.f32 %v694, 0.6931472
  %v696 = vlog2.pop %v665
  %v697 = vmul.f32 %v696, 0.6931472
  %v698 = vlog2.pop %v667
  %v699 = vmul.f32 %v698, 0.6931472
  %v700 = vlog2.pop %v669
  %v701 = vmul.f32 %v700, 0.6931472
  %v702 = vlog2.pop %v671
  %v703 = vmul.f32 %v702, 0.6931472
  %v704 = vlog2.pop %v673
  %v705 = vmul.f32 %v704, 0.6931472
  %v706 = vlog2.pop %v675
  %v707 = vmul.f32 %v706, 0.6931472
  %v708 = vlog2.pop %v677
  %v709 = vmul.f32 %v708, 0.6931472
  %v710 = vlog2.pop %v679
  %v711 = vmul.f32 %v710, 0.6931472
  %v712 = vlog2.pop %v681
  %v713 = vmul.f32 %v712, 0.6931472
  %v714 = vlog2.pop %v683
  %v715 = vmul.f32 %v714, 0.6931472
  %v716 = vlog2.pop %v685
  %v717 = vmul.f32 %v716, 0.6931472
  %v718 = vlog2.pop %v687
  %v719 = vmul.f32 %v718, 0.6931472
  %v720 = vlog2.pop %v689
  %v721 = vmul.f32 %v720, 0.6931472
  %v722 = vsub.f32 %v610, %v691
  %v723 = vsub.f32 %v611, %v693
  %v724 = vsub.f32 %v612, %v695
  %v725 = vsub.f32 %v613, %v697
  %v726 = vsub.f32 %v614, %v699
  %v727 = vsub.f32 %v615, %v701
  %v728 = vsub.f32 %v616, %v703
  %v729 = vsub.f32 %v617, %v705
  %v730 = vsub.f32 %v618, %v707
  %v731 = vsub.f32 %v619, %v709
  %v732 = vsub.f32 %v620, %v711
  %v733 = vsub.f32 %v621, %v713
  %v734 = vsub.f32 %v622, %v715
  %v735 = vsub.f32 %v623, %v717
  %v736 = vsub.f32 %v624, %v719
  %v737 = vsub.f32 %v625, %v721
  %738 = vst [vmem:[%s5] sm:$0xff] %v722
  %739 = vst [vmem:[%s5 + $0x8] sm:$0xff] %v723
  %740 = vst [vmem:[%s5 + $0x10] sm:$0xff] %v724
  %741 = vst [vmem:[%s5 + $0x18] sm:$0xff] %v725
  %742 = vst [vmem:[%s5 + $0x20] sm:$0xff] %v726
  %743 = vst [vmem:[%s5 + $0x28] sm:$0xff] %v727
  %744 = vst [vmem:[%s5 + $0x30] sm:$0xff] %v728
  %745 = vst [vmem:[%s5 + $0x38] sm:$0xff] %v729
  %746 = vst [vmem:[%s5 + $0x40] sm:$0xff] %v730
  %747 = vst [vmem:[%s5 + $0x48] sm:$0xff] %v731
  %748 = vst [vmem:[%s5 + $0x50] sm:$0xff] %v732
  %749 = vst [vmem:[%s5 + $0x58] sm:$0xff] %v733
  %750 = vst [vmem:[%s5 + $0x60] sm:$0xff] %v734
  %751 = vst [vmem:[%s5 + $0x68] sm:$0xff] %v735
  %752 = vst [vmem:[%s5 + $0x70] sm:$0xff] %v736
  %753 = vst [vmem:[%s5 + $0x78] sm:$0xff] %v737
  // Predicated region
  $region22: #{ngram_forward_batched.1} parent=0 // pred_check
    _
  $region23: #{ngram_forward_batched.1} parent=0 // pred_check_branch
    %755 = sbr.rel (0) target = $region25
  $region24: #{ngram_forward_batched.1} parent=0 // pred_region
    _
  $region25: #{ngram_forward_batched.1} parent=0 // pred_fallthru
    _
  // Predicated region
  $region26: #{ngram_forward_batched.1} parent=0 // pred_check
    _
  $region27: #{ngram_forward_batched.1} parent=0 // pred_check_branch
    %757 = sbr.rel (0) target = $region29
  $region28: #{ngram_forward_batched.1} parent=0 // pred_region
    _
  $region29: #{ngram_forward_batched.1} parent=0 // pred_fallthru
    _

</llo_original>
